<compile_context>
chip_gen: v7x
topology: tpu7x:2x2x1
jax: 0.10.0
libtpu: 0.0.40
codegen_flags: <defaults>
</compile_context>

<pallas_src>
import jax
import jax.numpy as jnp
from jax.experimental import pallas as pl
from jax.experimental.pallas import tpu as pltpu


def _center_loss_kernel(labels_ref, feats_ref, centers_ref, out_ref):
    # labels_ref:  VMEM (TB, 1) int32
    # feats_ref:   VMEM (TB, D) float
    # centers_ref: VMEM (C, D) float (resident across grid steps)
    # out_ref:     VMEM (1, 8, 128) f32 partial-sum slab for this batch tile
    labels = labels_ref[...]                                   # (TB, 1)
    tb = labels.shape[0]
    c = centers_ref.shape[0]

    # One-hot gather of the centers: (TB, C) @ (C, D) on the MXU.
    class_ids = jax.lax.broadcasted_iota(jnp.int32, (tb, c), 1)
    onehot = (labels == class_ids).astype(jnp.float32)         # (TB, C)
    centers = centers_ref[...].astype(jnp.float32)             # (C, D)
    gathered = jnp.dot(onehot, centers,
                       preferred_element_type=jnp.float32)     # (TB, D)

    diff = feats_ref[...].astype(jnp.float32) - gathered
    # PyTorch: dist = sum / 2.0 / batch_size_tensor, and CenterLoss2.forward
    # fills batch_size_tensor with 1, so the only division is by 2.
    partial = 0.5 * jnp.sum(diff * diff)

    # Broadcast the tile's partial sum over a lane-dense (8,128) slab; the
    # wrapper reads element [0, 0] of each tile.  Distinct output block per
    # grid step -> the batch axis can be "parallel" (v7x megacore).
    out_ref[...] = jnp.broadcast_to(partial, out_ref.shape).astype(jnp.float32)


def _round_up(x, m):
    return pl.cdiv(x, m) * m


def center_loss2(features, labels, centers, *, block_b=None):
    """Forward pass of CenterLoss2. Returns a (1,) float32 loss."""
    b, d = features.shape
    c, _ = centers.shape

    if block_b is None:
        block_b = min(512, _round_up(b, 8))
    block_b = _round_up(block_b, 8)
    b_pad = _round_up(b, block_b)
    num_tiles = b_pad // block_b

    if labels.dtype != jnp.int32:
        labels = labels.astype(jnp.int32)
    if b_pad != b:
        # Pad rows: features -> 0, labels -> -1 (never matches a class id, so
        # one-hot row is all zero and the padded rows contribute exactly 0).
        features = jnp.pad(features, ((0, b_pad - b), (0, 0)))
        labels = jnp.pad(labels, (0, b_pad - b), constant_values=-1)
    labels2d = labels.reshape(b_pad, 1)

    # Explicit VMEM budget: resident centers + double-buffered tiles.
    # Capped at 48 MiB so it stays under v7x's 64 MiB per-TC VMEM.
    elt = features.dtype.itemsize
    vmem_est = (c * d * centers.dtype.itemsize
                + 2 * (block_b * d * elt)      # feature tiles (double-buffered)
                + 2 * (block_b * 4)            # label tiles
                + 2 * (8 * 128 * 4))           # output slabs
    vmem_limit = int(min(max(2 * vmem_est, 8 << 20), 48 << 20))

    grid_spec = pltpu.PrefetchScalarGridSpec(
        num_scalar_prefetch=0,
        grid=(num_tiles,),
        in_specs=[
            pl.BlockSpec((block_b, 1), lambda i: (i, 0)),   # labels tile
            pl.BlockSpec((block_b, d), lambda i: (i, 0)),   # features tile
            pl.BlockSpec((c, d), lambda i: (0, 0)),         # centers (resident)
        ],
        out_specs=pl.BlockSpec((1, 8, 128), lambda i: (i, 0, 0)),
    )

    partials = pl.pallas_call(
        _center_loss_kernel,
        out_shape=jax.ShapeDtypeStruct((num_tiles, 8, 128), jnp.float32),
        grid_spec=grid_spec,
        compiler_params=pltpu.CompilerParams(
            dimension_semantics=("parallel",),
            vmem_limit_bytes=vmem_limit),
    )(labels2d, features, centers)

    # Sum the per-tile partials (tiny) and return a (1,) loss like the module.
    return jnp.sum(partials[:, 0, 0]).reshape(1)


if __name__ == "__main__":
    num_classes = 10
    feature_dim = 32
    batch = 20   # deliberately not a multiple of the tile to exercise padding

    key = jax.random.PRNGKey(0)
    k_feat, k_cent, k_lab = jax.random.split(key, 3)

    # Deterministic "parameter" init mirroring torch.randn(num_classes, feature_dim)
    centers = jax.random.normal(k_cent, (num_classes, feature_dim), jnp.float32)
    features = jax.random.normal(k_feat, (batch, feature_dim), jnp.float32)
    labels = jax.random.randint(k_lab, (batch,), 0, num_classes, jnp.int32)

    loss = center_loss2(features, labels, centers, block_b=16)  # -> 2 batch tiles
    jax.block_until_ready(loss)

    # Pure-JAX reference (same math as the PyTorch forward, divisor fixed at 1).
    ref = jnp.sum((features - centers[labels]) ** 2) / 2.0 / 1.0
    assert loss.shape == (1,)
    assert jnp.allclose(loss[0], ref, rtol=1e-5, atol=1e-5), (loss, ref)

    print("KERNEL_OK")
</pallas_src>

<mosaic_0001>
module attributes {stable_mosaic.version = 11 : i64} {
  func.func @_center_loss_kernel(%arg0: i32, %arg1: memref<16x1xi32, #tpu.memory_space<vmem>>, %arg2: memref<16x32xf32, #tpu.memory_space<vmem>>, %arg3: memref<10x32xf32, #tpu.memory_space<vmem>>, %arg4: memref<1x8x128xf32, #tpu.memory_space<vmem>>) attributes {dimension_semantics = [#tpu.dimension_semantics<parallel>], iteration_bounds = array<i64: 2>, scalar_prefetch = 0 : i64, scratch_operands = 0 : i64, tpu.core_type = #tpu.core_type<tc>, window_params = [{transform_indices = @transform_0, window_bounds = array<i64: 16, 1>}, {transform_indices = @transform_1, window_bounds = array<i64: 16, 32>}, {pipeline_mode = #tpu.pipeline_mode<synchronous>, transform_indices = @transform_2, window_bounds = array<i64: 10, 32>}, {transform_indices = @transform_3, window_bounds = array<i64: 1, 8, 128>}]} {
    %c0 = arith.constant 0 : index
    %c0_0 = arith.constant 0 : index
    %0 = vector.load %arg1[%c0, %c0_0] : memref<16x1xi32, #tpu.memory_space<vmem>>, vector<16x1xi32>
    %1 = tpu.iota {dimensions = array<i32: 1>} : vector<16x10xi32>
    %2 = vector.broadcast %0 : vector<16x1xi32> to vector<16x10xi32>
    %3 = arith.cmpi eq, %2, %1 : vector<16x10xi32>
    %4 = arith.extui %3 : vector<16x10xi1> to vector<16x10xi32>
    %5 = arith.sitofp %4 : vector<16x10xi32> to vector<16x10xf32>
    %c0_1 = arith.constant 0 : index
    %c0_2 = arith.constant 0 : index
    %6 = vector.load %arg3[%c0_1, %c0_2] : memref<10x32xf32, #tpu.memory_space<vmem>>, vector<10x32xf32>
    %cst = arith.constant dense<0.000000e+00> : vector<16x32xf32>
    %7 = tpu.matmul %5, %6, %cst {dimension_numbers = #tpu.dot_dimension_numbers<[1], [0], [0], [1], [0, 0, 1, 1], [], []>} : vector<16x10xf32>, vector<10x32xf32>, vector<16x32xf32> -> vector<16x32xf32>
    %c0_3 = arith.constant 0 : index
    %c0_4 = arith.constant 0 : index
    %8 = vector.load %arg2[%c0_3, %c0_4] : memref<16x32xf32, #tpu.memory_space<vmem>>, vector<16x32xf32>
    %9 = arith.subf %8, %7 : vector<16x32xf32>
    %10 = arith.mulf %9, %9 : vector<16x32xf32>
    %11 = vector.shape_cast %10 : vector<16x32xf32> to vector<1x16x32xf32>
    %cst_5 = arith.constant dense<0.000000e+00> : vector<1xf32>
    %12 = vector.multi_reduction <add>, %11, %cst_5 [1, 2] : vector<1x16x32xf32> to vector<1xf32>
    %13 = vector.shape_cast %12 : vector<1xf32> to vector<1x1x1xf32>
    %14 = vector.extract %13[0, 0, 0] : f32 from vector<1x1x1xf32>
    %cst_6 = arith.constant 5.000000e-01 : f32
    %15 = arith.mulf %cst_6, %14 : f32
    %16 = vector.broadcast %15 : f32 to vector<1x8x128xf32>
    %c0_7 = arith.constant 0 : index
    %c0_8 = arith.constant 0 : index
    %c0_9 = arith.constant 0 : index
    %17 = vector.load %arg4[%c0_7, %c0_8, %c0_9] : memref<1x8x128xf32, #tpu.memory_space<vmem>>, vector<1x8x128xf32>
    tpu.vector_store %arg4[%c0_7, %c0_8, %c0_9], %16 {strides = array<i32>} : memref<1x8x128xf32, #tpu.memory_space<vmem>>, vector<1x8x128xf32>,
    return
  }
  func.func @transform_0(%arg0: i32) -> (i32, i32) {
    %c0_i32 = arith.constant 0 : i32
    %c0_i32_0 = arith.constant 0 : i32
    return %arg0, %c0_i32 : i32, i32
  }
  func.func @transform_1(%arg0: i32) -> (i32, i32) {
    %c0_i32 = arith.constant 0 : i32
    %c0_i32_0 = arith.constant 0 : i32
    return %arg0, %c0_i32 : i32, i32
  }
  func.func @transform_2(%arg0: i32) -> (i32, i32) {
    %c0_i32 = arith.constant 0 : i32
    %c0_i32_0 = arith.constant 0 : i32
    %c0_i32_1 = arith.constant 0 : i32
    return %c0_i32, %c0_i32_0 : i32, i32
  }
  func.func @transform_3(%arg0: i32) -> (i32, i32, i32) {
    %c0_i32 = arith.constant 0 : i32
    %c0_i32_0 = arith.constant 0 : i32
    %c0_i32_1 = arith.constant 0 : i32
    return %arg0, %c0_i32, %c0_i32_0 : i32, i32, i32
  }
}

</mosaic_0001>

<llo_original>
// kernel: tpu_custom_call.1
$region0: #{tpu_custom_call.1}
  #allocation0 [shape = 'u32[]', space=smem, size = 0x4, offset = 0x4, fixed_abs, tag = 'smem constant byte address 0x4 - core index']
  #allocation1 [shape = 'u32[144,128]{1,0:T(1,128)}', space=vmem, size = 0x12000, scoped, tag = 'internal scratch']
  %s0 = inlined_call_operand.vmem [shape: s32[32,1], index: 0, kind: input, shape index: {}]
  %s1 = inlined_call_operand.vmem [shape: f32[32,32], index: 1, kind: input, shape index: {}]
  %s2 = inlined_call_operand.hbm [shape: f32[10,32], index: 2, kind: input, shape index: {}]
  %s3 = inlined_call_operand.hbm [shape: f32[2,8,128], index: 3, kind: output, shape index: {}]
  %s4 = sld [smem:[#allocation0]]
  $region49: #{tpu_custom_call.1} parent=0
    _
  %s6 = ssub.s32 1, %s4
  %s7 = scalar_select 0, %s6, %s4
  $region1: #{tpu_custom_call.1} parent=0
    #allocation2 [shape = 'u8[8192]{0}', space=vmem, size = 0x2000, scoped, tag = 'input window, operand 2, single buffered']
    #allocation3 [shape = 's32[2]{0}', space=sflag, size = 0x8, scoped, tag = 'scoped memory for tpu_custom_call.1']
    #allocation4 [shape = 's32[2]{0}', space=sflag, size = 0x8, scoped, tag = 'scoped memory for tpu_custom_call.1']
    #allocation5 [shape = 'u8[8192]{0}', space=vmem, size = 0x2000, scoped, tag = 'output window, operand 0']
    %8 = vsyncpa [#allocation3], 0
    %9 = vsyncpa [#allocation4], 0
    %s10 = scalar_lea.sflag [#allocation4], 1
    %11 = vsyncpa %s10, 0
    loop: start=0, step=1, limit=4
    $region2: #{tpu_custom_call.1} parent=1 // loop_pre_header
      _
    $region3: #{tpu_custom_call.1} parent=1 // loop_header
      %s13 = sphi 0, %s17
      %p14 = scmp.ge.s32.totalorder %s13, 4
      %s23 = sphi 0, %s25
      %s26 = sphi 0, %s23
      %s27 = sphi 0, %s26
      %s43 = sphi 0, %s27
      %s49 = sphi 0, %s51
      %s52 = sphi 0, %s49
      %s53 = sphi 0, %s52
      %s69 = sphi 0, %s53
      %s73 = sphi 0, %s73
      %s75 = sphi 0, %s73
      %s76 = sphi 0, %s75
      %s90 = sphi 0, %s76
      %s96 = sphi 0, %s98
      %s99 = sphi 0, %s96
      %s100 = sphi 0, %s99
      %s116 = sphi 0, %s100
    $region4: #{tpu_custom_call.1} parent=1 // loop_header_branch
      %16 = sbr.rel (%p14) target = $region8
    $region5: #{tpu_custom_call.1} parent=1 // loop_body
      %s18 = ssub.s32 %s13, 1
      %s19 = ssub.s32 %s13, 2
      %s20 = sadd.s32 %s13, 1
      %s21 = ssub.s32 %s13, %s20
      %p22 = scmp.eq.s32.totalorder %s21, 0
      %s24 = sadd.s32 %s23, 1
      %s25 = scalar_select %p22, %s23, %s24
      %p28 = pneg %p22
      %p29 = scmp.eq.s32.totalorder %s13, 1
      %p30 = por %p28, %p29
      %p31 = scmp.ne.s32.totalorder %s23, %s26
      %p32 = scmp.eq.s32.totalorder %s13, 0
      %p33 = por %p31, %p32
      %p34 = scmp.ne.s32.totalorder %s23, %s26
      %p35 = scmp.eq.s32.totalorder %s18, 1
      %p36 = por %p34, %p35
      %p37 = scmp.ne.s32.totalorder %s26, %s27
      %p38 = scmp.eq.s32.totalorder %s18, 0
      %p39 = por %p37, %p38
      %p40 = scmp.ne.s32.totalorder %s26, %s27
      %p41 = scmp.eq.s32.totalorder %s19, 1
      %p42 = por %p40, %p41
      %p44 = scmp.ne.s32.totalorder %s27, %s43
      %p45 = scmp.eq.s32.totalorder %s19, 0
      %p46 = por %p44, %p45
      %s47 = ssub.s32 %s13, %s20
      %p48 = scmp.eq.s32.totalorder %s47, 0
      %s50 = sadd.s32 %s49, 1
      %s51 = scalar_select %p48, %s49, %s50
      %p54 = pneg %p48
      %p55 = scmp.eq.s32.totalorder %s13, 1
      %p56 = por %p54, %p55
      %p57 = scmp.ne.s32.totalorder %s49, %s52
      %p58 = scmp.eq.s32.totalorder %s13, 0
      %p59 = por %p57, %p58
      %p60 = scmp.ne.s32.totalorder %s49, %s52
      %p61 = scmp.eq.s32.totalorder %s18, 1
      %p62 = por %p60, %p61
      %p63 = scmp.ne.s32.totalorder %s52, %s53
      %p64 = scmp.eq.s32.totalorder %s18, 0
      %p65 = por %p63, %p64
      %p66 = scmp.ne.s32.totalorder %s52, %s53
      %p67 = scmp.eq.s32.totalorder %s19, 1
      %p68 = por %p66, %p67
      %p70 = scmp.ne.s32.totalorder %s53, %s69
      %p71 = scmp.eq.s32.totalorder %s19, 0
      %p72 = por %p70, %p71
      %s74 = sadd.s32 %s73, 1
      %p77 = scmp.eq.s32.totalorder %s13, 1
      %p78 = scmp.ne.s32.totalorder %s73, %s75
      %p79 = scmp.eq.s32.totalorder %s13, 0
      %p80 = por %p78, %p79
      %p81 = scmp.ne.s32.totalorder %s73, %s75
      %p82 = scmp.eq.s32.totalorder %s18, 1
      %p83 = por %p81, %p82
      %p84 = scmp.ne.s32.totalorder %s75, %s76
      %p85 = scmp.eq.s32.totalorder %s18, 0
      %p86 = por %p84, %p85
      %p87 = scmp.ne.s32.totalorder %s75, %s76
      %p88 = scmp.eq.s32.totalorder %s19, 1
      %p89 = por %p87, %p88
      %p91 = scmp.ne.s32.totalorder %s76, %s90
      %p92 = scmp.eq.s32.totalorder %s19, 0
      %p93 = por %p91, %p92
      %s94 = ssub.s32 %s13, %s20
      %p95 = scmp.eq.s32.totalorder %s94, 0
      %s97 = sadd.s32 %s96, 1
      %s98 = scalar_select %p95, %s96, %s97
      %p101 = pneg %p95
      %p102 = scmp.eq.s32.totalorder %s13, 1
      %p103 = por %p101, %p102
      %p104 = scmp.ne.s32.totalorder %s96, %s99
      %p105 = scmp.eq.s32.totalorder %s13, 0
      %p106 = por %p104, %p105
      %p107 = scmp.ne.s32.totalorder %s96, %s99
      %p108 = scmp.eq.s32.totalorder %s18, 1
      %p109 = por %p107, %p108
      %p110 = scmp.ne.s32.totalorder %s99, %s100
      %p111 = scmp.eq.s32.totalorder %s18, 0
      %p112 = por %p110, %p111
      %p113 = scmp.ne.s32.totalorder %s99, %s100
      %p114 = scmp.eq.s32.totalorder %s19, 1
      %p115 = por %p113, %p114
      %p117 = scmp.ne.s32.totalorder %s100, %s116
      %p118 = scmp.eq.s32.totalorder %s19, 0
      %p119 = por %p117, %p118
      %p120 = scmp.le.s32.totalorder 1, %s13
      %p121 = scmp.lt.s32.totalorder %s13, 3
      %p122 = pnand %p120, %p121
      %p123 = pneg %p122
      // Predicated region
      $region9: #{tpu_custom_call.1} parent=5 // pred_check
        _
      $region10: #{tpu_custom_call.1} parent=5 // pred_check_branch
        %125 = sbr.rel (%p122) target = $region12
      $region11: #{tpu_custom_call.1} parent=5 // pred_region
        %s126 = ssub.s32 %s13, 1
        // Predicated region
        $region13: #{tpu_custom_call.1} parent=11 // pred_check
          %p127 = pneg %p86
        $region14: #{tpu_custom_call.1} parent=11 // pred_check_branch
          %129 = sbr.rel (%p127) target = $region16
        $region15: #{tpu_custom_call.1} parent=11 // pred_region
          %s131 = ssub.s32 256, 256
          %132 = vsyncadd [#allocation3], %s131
          %s133 = sshll.u32 [#allocation2], 4
          %s134 = int_to_ptr.vmem [resolvable:$true] %s133
          %139 = dma.hbm_to_vmem [thread:$0]  %s2, 256, %s134, [#allocation3], 128, 128, 8
        $region16: #{tpu_custom_call.1} parent=11 // pred_fallthru
          _
      $region12: #{tpu_custom_call.1} parent=5 // pred_fallthru
        _
      %p140 = scmp.lt.s32.totalorder %s13, 2
      // Predicated region
      $region17: #{tpu_custom_call.1} parent=5 // pred_check
        %p141 = pneg %p140
      $region18: #{tpu_custom_call.1} parent=5 // pred_check_branch
        %143 = sbr.rel (%p141) target = $region20
      $region19: #{tpu_custom_call.1} parent=5 // pred_region
        // Predicated region
        $region21: #{tpu_custom_call.1} parent=19 // pred_check
          %p144 = pneg %p33
        $region22: #{tpu_custom_call.1} parent=19 // pred_check_branch
          %146 = sbr.rel (%p144) target = $region24
        $region23: #{tpu_custom_call.1} parent=19 // pred_region
          %s147 = smul.u32 2, %s13
          %p148 = scmp.lt.s32.totalorder %s147, 3
          %s149 = scalar_select %p148, %s147, 3
          %s150 = smul.addr %s149, 8
          %s151 = scalar_lea.vmem %s0, %s150
          %s152 = smul.u32 2, %s13
        $region24: #{tpu_custom_call.1} parent=19 // pred_fallthru
          _
        // Predicated region
        $region25: #{tpu_custom_call.1} parent=19 // pred_check
          %p153 = pneg %p59
        $region26: #{tpu_custom_call.1} parent=19 // pred_check_branch
          %155 = sbr.rel (%p153) target = $region28
        $region27: #{tpu_custom_call.1} parent=19 // pred_region
          %s156 = smul.u32 2, %s13
          %p157 = scmp.lt.s32.totalorder %s156, 3
          %s158 = scalar_select %p157, %s156, 3
          %s159 = smul.addr %s158, 8
          %s160 = scalar_lea.vmem %s1, %s159
          %s161 = smul.u32 2, %s13
        $region28: #{tpu_custom_call.1} parent=19 // pred_fallthru
          _
      $region20: #{tpu_custom_call.1} parent=5 // pred_fallthru
        _
      %p162 = scmp.le.s32.totalorder 1, %s13
      %p163 = scmp.lt.s32.totalorder %s13, 3
      %p164 = pnand %p162, %p163
      %p165 = pneg %p164
      // Predicated region
      $region29: #{tpu_custom_call.1} parent=5 // pred_check
        _
      $region30: #{tpu_custom_call.1} parent=5 // pred_check_branch
        %167 = sbr.rel (%p164) target = $region32
      $region31: #{tpu_custom_call.1} parent=5 // pred_region
        %s168 = ssub.s32 %s13, 1
        // Predicated region
        $region33: #{tpu_custom_call.1} parent=31 // pred_check
          %p169 = pneg %p86
        $region34: #{tpu_custom_call.1} parent=31 // pred_check_branch
          %171 = sbr.rel (%p169) target = $region36
        $region35: #{tpu_custom_call.1} parent=31 // pred_region
          %172 = dma.done [#allocation3], 256
        $region36: #{tpu_custom_call.1} parent=31 // pred_fallthru
          _
        %s173 = smul.u32 2, %s18
        %p174 = scmp.lt.s32.totalorder %s173, 3
        %s175 = scalar_select %p174, %s173, 3
        %s176 = smul.addr %s175, 8
        %s177 = scalar_lea.vmem %s0, %s176
        %p178 = pneg %p39
        %p179 = pneg %p36
        %s180 = smul.u32 2, %s18
        %p181 = scmp.lt.s32.totalorder %s180, 3
        %s182 = scalar_select %p181, %s180, 3
        %s183 = smul.addr %s182, 8
        %s184 = scalar_lea.vmem %s1, %s183
        %p185 = pneg %p65
        %p186 = pneg %p62
        %p187 = pneg %p86
        %p188 = pneg %p83
        %p189 = pneg %p112
        %p190 = pneg %p109
        %s191 = sand.u32 %s99, 1
        %s192 = scalar_lea.sflag [#allocation4], %s191
        %s193 = sand.u32 %s99, 1
        %s194 = smul.addr %s193, 8
        %s195 = scalar_lea.vmem [#allocation5], %s194
        %s196 = smul.u32 2, %s18
        %p197 = scmp.lt.s32.totalorder %s196, 3
        %s198 = scalar_select %p197, %s196, 3
        %s199 = smul.addr %s198, 8
        %s200 = scalar_lea.vmem %s0, %s199
        %s201 = smul.u32 2, %s18
        %s202 = smul.u32 2, %s18
        %p203 = scmp.lt.s32.totalorder %s202, 3
        %s204 = scalar_select %p203, %s202, 3
        %s205 = smul.addr %s204, 8
        %s206 = scalar_lea.vmem %s1, %s205
        %s207 = smul.u32 2, %s18
        %v208 = vld [vmem:[%s200] sm:$0xff]
        %v209 = vld [vmem:[%s200 + $0x8] sm:$0xff]
        %v210 = vlaneseq
        %v211 = vand.u32 %v210, 127
        %212 = vset.pattern.permute.xlu0 0
        %213 = vperm.xlu0 %212, %v208
        %v214 = vpop.permute.xlu0 %213
        %215 = vset.pattern.permute.xlu0 0
        %216 = vperm.xlu0 %215, %v209
        %v217 = vpop.permute.xlu0 %216
        %vm218 = vcmp.eq.s32.totalorder %v214, %v211
        %vm219 = vcmp.eq.s32.totalorder %v217, %v211
        %v220 = vsel %vm218, 1, 0
        %v221 = vsel %vm219, 1, 0
        %v222 = vcvt.s32.f32 %v220
        %v223 = vcvt.s32.f32 %v221
        %v224 = vld [vmem:[#allocation2] sm:$0xff]
        %v225 = vld [vmem:[#allocation2 + $0x8] sm:$0x3]
        %vm226 = vcmask 80896
        %v228 = vsel %vm226, %v222, 0
        %v231 = vsel %vm226, %v223, 0
        %vm233 = vcmask 1041408
        %v235 = vsel %vm233, %v225, 0
        %237 = vmatprep.subr.mxu0 0.0
        %238 = vmatpush1.msra.mxu0 %v224
        %239 = vmatprep.subr.mxu0 0.0
        %240 = vmatpush1.msra.mxu0 %v235
        %241 = vmatprep.subr.mxu0 0.0
        %242 = vmatpush1.msra.mxu0 0.0
        %243 = vmatprep.subr.mxu0 0.0
        %244 = vmatpush1.msra.mxu0 0.0
        %245 = vmatprep.subr.mxu0 0.0
        %246 = vmatpush1.msra.mxu0 0.0
        %247 = vmatprep.subr.mxu0 0.0
        %248 = vmatpush1.msra.mxu0 0.0
        %249 = vmatprep.subr.mxu0 0.0
        %250 = vmatpush1.msra.mxu0 0.0
        %251 = vmatprep.subr.mxu0 0.0
        %252 = vmatpush1.msra.mxu0 0.0
        %253 = vmatprep.subr.mxu0 0.0
        %254 = vmatpush1.msra.mxu0 0.0
        %255 = vmatprep.subr.mxu0 0.0
        %256 = vmatpush1.msra.mxu0 0.0
        %257 = vmatprep.subr.mxu0 0.0
        %258 = vmatpush1.msra.mxu0 0.0
        %259 = vmatprep.subr.mxu0 0.0
        %260 = vmatpush1.msra.mxu0 0.0
        %261 = vmatprep.subr.mxu0 0.0
        %262 = vmatpush1.msra.mxu0 0.0
        %263 = vmatprep.subr.mxu0 0.0
        %264 = vmatpush1.msra.mxu0 0.0
        %265 = vmatprep.subr.mxu0 0.0
        %266 = vmatpush1.msra.mxu0 0.0
        %267 = vmatprep.subr.mxu0 0.0
        %268 = vmatpush1.msra.mxu0 0.0
        %269 = vmatprep.subr.mxu0 0.0
        %270 = vmatpush1.msra.mxu0 0.0
        %271 = vmatprep.subr.mxu0 0.0
        %272 = vmatpush1.msra.mxu0 0.0
        %273 = vmatprep.subr.mxu0 0.0
        %274 = vmatpush1.msra.mxu0 0.0
        %275 = vmatprep.subr.mxu0 0.0
        %276 = vmatpush1.msra.mxu0 0.0
        %277 = vmatprep.subr.mxu0 0.0
        %278 = vmatpush1.msra.mxu0 0.0
        %279 = vmatprep.subr.mxu0 0.0
        %280 = vmatpush1.msra.mxu0 0.0
        %281 = vmatprep.subr.mxu0 0.0
        %282 = vmatpush1.msra.mxu0 0.0
        %283 = vmatprep.subr.mxu0 0.0
        %284 = vmatpush1.msra.mxu0 0.0
        %285 = vmatprep.subr.mxu0 0.0
        %286 = vmatpush1.msra.mxu0 0.0
        %287 = vmatprep.subr.mxu0 0.0
        %288 = vmatpush1.msra.mxu0 0.0
        %289 = vmatprep.subr.mxu0 0.0
        %290 = vmatpush1.msra.mxu0 0.0
        %291 = vmatprep.subr.mxu0 0.0
        %292 = vmatpush1.msra.mxu0 0.0
        %293 = vmatprep.subr.mxu0 0.0
        %294 = vmatpush1.msra.mxu0 0.0
        %295 = vmatprep.subr.mxu0 0.0
        %296 = vmatpush1.msra.mxu0 0.0
        %297 = vmatprep.subr.mxu0 0.0
        %298 = vmatpush1.msra.mxu0 0.0
        %299 = vmatprep.subr.mxu0 0.0
        %300 = vmatpush1.msra.mxu0 0.0
        %301 = vmatprep.mubr.f32.mxu0 0.0
        %302 = vmatmul.mubr.f32.gmra.mrb[0].mxu0 %v228
        %v303 = vpop.f32.mrb[0].mxu0
        %v304 = vadd.f32 0.0, %v303
        %v305 = vpop.f32.mrb[0].mxu0
        %306 = vmatprep.mubr.f32.mxu0 0.0
        %307 = vmatmul.mubr.f32.gmra.mrb[0].mxu0 %v231
        %v308 = vpop.f32.mrb[0].mxu0
        %v309 = vadd.f32 0.0, %v308
        %v310 = vpop.f32.mrb[0].mxu0
        %311 = vdwg.mxu0
        %v312 = vld [vmem:[%s206] sm:$0xff]
        %v313 = vld [vmem:[%s206 + $0x8] sm:$0xff]
        %v314 = vsub.f32 %v312, %v304
        %v315 = vsub.f32 %v313, %v309
        %v316 = vmul.f32 %v314, %v314
        %v317 = vmul.f32 %v315, %v315
        %vm318 = vcmask 261120
        %v319 = vsel %vm318, %v316, 0.0
        %v320 = vsel %vm318, %v317, 0.0
        %v321 = vadd.f32 %v319, %v320
        %322 = vadd.xlane.f32.xlu0 %v321
        %v323 = vpop.xlane.xlu0 %322
        %v324 = vrot.slane %v323, 4
        %v325 = vadd.f32 %v323, %v324
        %v326 = vrot.slane %v325, 2
        %v327 = vadd.f32 %v325, %v326
        %v328 = vrot.slane %v327, 1
        %v329 = vadd.f32 %v327, %v328
        %s330 = vtos %v329
        %s331 = smul.f32 %s330, 0.5
        %v332 = vstv %s331
        %333 = vst [vmem:[%s195] sm:$0xff] %v332
        %s334 = sand.u32 %s99, 1
        %s335 = scalar_lea.sflag [#allocation4], %s334
        %s336 = sand.u32 %s99, 1
        %s337 = smul.addr %s336, 8
        %s338 = scalar_lea.vmem [#allocation5], %s337
        // Predicated region
        $region37: #{tpu_custom_call.1} parent=31 // pred_check
          %p339 = pneg %p109
        $region38: #{tpu_custom_call.1} parent=31 // pred_check_branch
          %341 = sbr.rel (%p339) target = $region40
        $region39: #{tpu_custom_call.1} parent=31 // pred_region
          %s343 = ssub.s32 128, 128
          %344 = vsyncadd %s335, %s343
          %s345 = smul.addr %s18, 128
          %s346 = scalar_lea.hbm %s3, %s345
          %s348 = sshll.u32 %s338, 4
          %s349 = int_to_ptr.vmem [resolvable:$true] %s348
          %351 = dma.vmem_to_hbm [thread:$0]  %s349, 128, %s346, %s335
        $region40: #{tpu_custom_call.1} parent=31 // pred_fallthru
          _
      $region32: #{tpu_custom_call.1} parent=5 // pred_fallthru
        _
      %p352 = scmp.le.s32.totalorder 2, %s13
      // Predicated region
      $region41: #{tpu_custom_call.1} parent=5 // pred_check
        %p353 = pneg %p352
      $region42: #{tpu_custom_call.1} parent=5 // pred_check_branch
        %355 = sbr.rel (%p353) target = $region44
      $region43: #{tpu_custom_call.1} parent=5 // pred_region
        %s356 = ssub.s32 %s13, 2
        // Predicated region
        $region45: #{tpu_custom_call.1} parent=43 // pred_check
          %p357 = pneg %p115
        $region46: #{tpu_custom_call.1} parent=43 // pred_check_branch
          %359 = sbr.rel (%p357) target = $region48
        $region47: #{tpu_custom_call.1} parent=43 // pred_region
          %s360 = sand.u32 %s100, 1
          %s361 = scalar_lea.sflag [#allocation4], %s360
          %s362 = sand.u32 %s100, 1
          %s363 = smul.addr %s362, 8
          %s364 = scalar_lea.vmem [#allocation5], %s363
          %365 = dma.done %s361, 128
        $region48: #{tpu_custom_call.1} parent=43 // pred_fallthru
          _
      $region44: #{tpu_custom_call.1} parent=5 // pred_fallthru
        _
    $region6: #{tpu_custom_call.1} parent=1 // loop_footer
      %s17 = sadd.s32 1, %s13
    $region7: #{tpu_custom_call.1} parent=1 // loop_footer_branch
      %12 = sbr.rel target = $region3
    $region8: #{tpu_custom_call.1} parent=1 // loop_exit
      _
    %366 = vsyncpa [#allocation3], 1
    %s367 = scalar_lea.sflag [#allocation3], 1
    %368 = vsyncpa %s367, 1
    %369 = vsyncpa [#allocation4], 1
    %s370 = scalar_lea.sflag [#allocation4], 1
    %371 = vsyncpa %s370, 1

</llo_original>
